<compile_context>
chip_gen: v6e
topology: v6e:2x2x1
jax: 0.10.0
libtpu: 0.0.40
codegen_flags: <defaults>
</compile_context>

<pallas_src>
import math

import jax
import jax.numpy as jnp
from jax.experimental import pallas as pl
from jax.experimental.pallas import tpu as pltpu


# ----------------------------------------------------------------------------
# Kernel
# ----------------------------------------------------------------------------
def _make_fourier_kernel(num_dims: int, dk: int, concat_pos: bool,
                         sine_only: bool):
    """Kernel over a transposed, lane-dense (enc_dim, tile_n) output block.

    Row layout of the output block (matches [pos, sin, cos] feature order of
    the reference, just transposed):
        rows [0, D)              : positions            (if concat_pos)
        rows [off, off+D*K)      : sin(pi * pos * freq)
        rows [off+D*K, off+2D*K) : cos(pi * pos * freq)  (if not sine_only)
    """
    if concat_pos:
        def kernel(pos_ref, arg_ref, out_ref):
            # pos_ref: (D, tile_n), arg_ref: (D*K, tile_n)  (already pi-scaled)
            arg = arg_ref[...]
            out_ref[0:num_dims, :] = pos_ref[...]
            out_ref[num_dims:num_dims + dk, :] = jnp.sin(arg)
            if not sine_only:
                out_ref[num_dims + dk:num_dims + 2 * dk, :] = jnp.cos(arg)
    else:
        def kernel(arg_ref, out_ref):
            arg = arg_ref[...]
            out_ref[0:dk, :] = jnp.sin(arg)
            if not sine_only:
                out_ref[dk:2 * dk, :] = jnp.cos(arg)
    return kernel


def _pick_tile_n(n: int) -> int:
    """Largest lane-aligned tile (<=512) that divides N; else full-dim block."""
    for t in (512, 256, 128):
        if n % t == 0:
            return t
    return n  # full-dim fallback (legal: block dim == array dim)


# ----------------------------------------------------------------------------
# Module-equivalent wrapper
# ----------------------------------------------------------------------------
class FourierPositionEncodingPallas:
    def __init__(self, index_dims, num_bands, output_range=(-1.0, 1.0),
                 concat_pos=True, sine_only=False):
        self.index_dims = tuple(index_dims)
        self.num_bands = num_bands
        self.output_range = output_range
        self.concat_pos = concat_pos
        self.sine_only = sine_only
        self.num_dims = len(self.index_dims)

        # --- glue: linear position grid (matches _build_linear_positions) ---
        dim_ranges = [
            jnp.linspace(output_range[0], output_range[1], n, dtype=jnp.float32)
            for n in self.index_dims
        ]
        grid = jnp.meshgrid(*dim_ranges, indexing="ij")
        pos = jnp.stack(grid, axis=self.num_dims)              # (*dims, D)
        self.pos = pos.reshape(-1, pos.shape[-1])               # (N, D)

        # --- glue: frequency bands (matches _generate_fourier_features) ---
        self.freq_bands = jnp.stack(
            [jnp.linspace(1.0, res / 2.0, num_bands, dtype=jnp.float32)
             for res in self.index_dims],
            axis=0,
        )                                                        # (D, K)

        N, D = self.pos.shape
        K = self.num_bands
        self.dk = D * K

        # Precompute (at init, exactly as the PyTorch module does) the
        # pi-scaled outer product, transposed so N is the lane axis.
        feats = self.pos[:, :, None] * self.freq_bands[None, :, :]   # (N, D, K)
        feats = feats.reshape(N, self.dk)                            # (N, D*K)
        self.arg_t = jnp.asarray((jnp.float32(math.pi) * feats).T)   # (D*K, N)
        self.pos_t = jnp.asarray(self.pos.T)                         # (D, N)

        enc_dim = self.dk
        if not sine_only:
            enc_dim *= 2
        if concat_pos:
            enc_dim += D
        self.enc_dim = enc_dim

        self._tile_n = _pick_tile_n(N)
        self._kernel = _make_fourier_kernel(D, self.dk, concat_pos, sine_only)

    def __call__(self, x):
        """x: any array whose leading axis is the batch size."""
        batch_size = x.shape[0]
        N, D = self.pos.shape
        tile_n = self._tile_n
        grid = (N // tile_n,)

        in_arrays = []
        in_specs = []
        if self.concat_pos:
            in_arrays.append(self.pos_t)
            in_specs.append(pl.BlockSpec((D, tile_n), lambda i: (0, i)))
        in_arrays.append(self.arg_t)
        in_specs.append(pl.BlockSpec((self.dk, tile_n), lambda i: (0, i)))

        enc_t = pl.pallas_call(
            self._kernel,
            out_shape=jax.ShapeDtypeStruct((self.enc_dim, N), jnp.float32),
            grid_spec=pltpu.PrefetchScalarGridSpec(
                num_scalar_prefetch=0,
                grid=grid,
                in_specs=in_specs,
                out_specs=pl.BlockSpec((self.enc_dim, tile_n),
                                       lambda i: (0, i)),
            ),
            compiler_params=pltpu.CompilerParams(
                dimension_semantics=("parallel",)),
        )(*in_arrays)                                            # (enc_dim, N)

        # Layout plumbing outside the kernel: back to (N, enc_dim), then the
        # (cheap / lazily-materialized) batch broadcast.
        enc = enc_t.T                                            # (N, enc_dim)
        return jnp.broadcast_to(enc[None], (batch_size, N, self.enc_dim))


# ----------------------------------------------------------------------------
# Pure-JAX reference (mirrors the PyTorch code) for correctness checking
# ----------------------------------------------------------------------------
def _reference(module: FourierPositionEncodingPallas, batch_size: int):
    pos = module.pos                                             # (N, D)
    freq = module.freq_bands                                     # (D, K)
    feats = pos[:, :, None] * freq[None, :, :]                   # (N, D, K)
    feats = feats.reshape(feats.shape[0], -1)                    # (N, D*K)
    if module.sine_only:
        feats = jnp.sin(math.pi * feats)
    else:
        feats = jnp.concatenate(
            [jnp.sin(math.pi * feats), jnp.cos(math.pi * feats)], axis=-1)
    if module.concat_pos:
        feats = jnp.concatenate([pos, feats], axis=-1)
    return jnp.broadcast_to(feats[None], (batch_size,) + feats.shape)


# ----------------------------------------------------------------------------
# Demo
# ----------------------------------------------------------------------------
if __name__ == "__main__":
    key = jax.random.PRNGKey(0)

    batch = 2
    index_dims = (16, 16)
    num_bands = 8

    # Forward only uses x for its batch size; give it an NCHW-ish input.
    x = jax.random.normal(key, (batch, 4, 16, 16), dtype=jnp.float32)

    module = FourierPositionEncodingPallas(
        index_dims=index_dims, num_bands=num_bands,
        output_range=(-1.0, 1.0), concat_pos=True, sine_only=False)

    out = module(x)
    out = jax.block_until_ready(out)

    ref = _reference(module, batch)
    expected_enc_dim = 2 + 2 * 2 * num_bands
    assert out.shape == (batch, 16 * 16, expected_enc_dim), out.shape
    assert jnp.allclose(out, ref, atol=1e-5, rtol=1e-5), "mismatch vs reference"

    # Also exercise the sine_only / no-concat_pos variant for coverage.
    module2 = FourierPositionEncodingPallas(
        index_dims=index_dims, num_bands=num_bands,
        output_range=(-1.0, 1.0), concat_pos=False, sine_only=True)
    out2 = jax.block_until_ready(module2(x))
    ref2 = _reference(module2, batch)
    assert out2.shape == (batch, 16 * 16, 2 * num_bands), out2.shape
    assert jnp.allclose(out2, ref2, atol=1e-5, rtol=1e-5), "mismatch (variant)"

    print("KERNEL_OK")
</pallas_src>

<mosaic_0001>
module attributes {stable_mosaic.version = 11 : i64} {
  func.func @kernel(%arg0: i32, %arg1: memref<2x256xf32, #tpu.memory_space<vmem>>, %arg2: memref<16x256xf32, #tpu.memory_space<vmem>>, %arg3: memref<34x256xf32, #tpu.memory_space<vmem>>) attributes {dimension_semantics = [#tpu.dimension_semantics<parallel>], iteration_bounds = array<i64: 1>, scalar_prefetch = 0 : i64, scratch_operands = 0 : i64, tpu.core_type = #tpu.core_type<tc>, window_params = [{transform_indices = @transform_0, window_bounds = array<i64: 2, 256>}, {transform_indices = @transform_1, window_bounds = array<i64: 16, 256>}, {transform_indices = @transform_2, window_bounds = array<i64: 34, 256>}]} {
    %c0 = arith.constant 0 : index
    %c0_0 = arith.constant 0 : index
    %0 = vector.load %arg2[%c0, %c0_0] : memref<16x256xf32, #tpu.memory_space<vmem>>, vector<16x256xf32>
    %c0_1 = arith.constant 0 : index
    %c0_2 = arith.constant 0 : index
    %1 = vector.load %arg1[%c0_1, %c0_2] : memref<2x256xf32, #tpu.memory_space<vmem>>, vector<2x256xf32>
    %c0_3 = arith.constant 0 : index
    %c0_4 = arith.constant 0 : index
    %2 = vector.load %arg3[%c0_3, %c0_4] : memref<34x256xf32, #tpu.memory_space<vmem>>, vector<2x256xf32>
    tpu.vector_store %arg3[%c0_3, %c0_4], %1 {strides = array<i32>} : memref<34x256xf32, #tpu.memory_space<vmem>>, vector<2x256xf32>,
    %3 = math.sin %0 : vector<16x256xf32>
    %c2 = arith.constant 2 : index
    %c0_5 = arith.constant 0 : index
    %4 = vector.load %arg3[%c2, %c0_5] : memref<34x256xf32, #tpu.memory_space<vmem>>, vector<16x256xf32>
    tpu.vector_store %arg3[%c2, %c0_5], %3 {strides = array<i32>} : memref<34x256xf32, #tpu.memory_space<vmem>>, vector<16x256xf32>,
    %5 = math.cos %0 : vector<16x256xf32>
    %c18 = arith.constant 18 : index
    %c0_6 = arith.constant 0 : index
    %6 = vector.load %arg3[%c18, %c0_6] : memref<34x256xf32, #tpu.memory_space<vmem>>, vector<16x256xf32>
    tpu.vector_store %arg3[%c18, %c0_6], %5 {strides = array<i32>} : memref<34x256xf32, #tpu.memory_space<vmem>>, vector<16x256xf32>,
    return
  }
  func.func @transform_0(%arg0: i32) -> (i32, i32) {
    %c0_i32 = arith.constant 0 : i32
    %c0_i32_0 = arith.constant 0 : i32
    return %c0_i32, %arg0 : i32, i32
  }
  func.func @transform_1(%arg0: i32) -> (i32, i32) {
    %c0_i32 = arith.constant 0 : i32
    %c0_i32_0 = arith.constant 0 : i32
    return %c0_i32, %arg0 : i32, i32
  }
  func.func @transform_2(%arg0: i32) -> (i32, i32) {
    %c0_i32 = arith.constant 0 : i32
    %c0_i32_0 = arith.constant 0 : i32
    return %c0_i32, %arg0 : i32, i32
  }
}

</mosaic_0001>

<llo_original>
// kernel: tpu_custom_call.1
$region0: #{tpu_custom_call.1}
  #allocation0 [shape = 'u32[]', space=smem, size = 0x4, offset = 0x4, fixed_abs, tag = 'smem constant byte address 0x4 - core index']
  #allocation1 [shape = 'u32[144,128]{1,0:T(1,128)}', space=vmem, size = 0x12000, scoped, tag = 'internal scratch']
  %s0 = inlined_call_operand.hbm [shape: f32[2,256], index: 0, kind: input, shape index: {}]
  %s1 = inlined_call_operand.hbm [shape: f32[16,256], index: 1, kind: input, shape index: {}]
  %s2 = inlined_call_operand.hbm [shape: f32[34,256], index: 2, kind: output, shape index: {}]
  %s3 = sld [smem:[#allocation0]]
  $region26: #{tpu_custom_call.1} parent=0
    _
  %s5 = ssub.s32 1, %s3
  %s6 = scalar_select 0, %s5, %s3
  $region1: #{tpu_custom_call.1} parent=0
    #allocation2 [shape = 'u8[2048]{0}', space=vmem, size = 0x800, scoped, tag = 'input window, operand 0, single buffered']
    #allocation3 [shape = 's32[1]{0}', space=sflag, size = 0x4, scoped, tag = 'scoped memory for tpu_custom_call.1']
    #allocation4 [shape = 's32[1]{0}', space=sflag, size = 0x4, scoped, tag = 'scoped memory for tpu_custom_call.1']
    #allocation5 [shape = 'u8[16384]{0}', space=vmem, size = 0x4000, scoped, tag = 'input window, operand 1, single buffered']
    #allocation6 [shape = 's32[1]{0}', space=sflag, size = 0x4, scoped, tag = 'scoped memory for tpu_custom_call.1']
    #allocation7 [shape = 'u8[40960]{0}', space=vmem, size = 0xa000, scoped, tag = 'output window, operand 0, single buffered']
    %7 = vsyncpa [#allocation3], 0
    %8 = vsyncpa [#allocation6], 0
    %9 = vsyncpa [#allocation4], 0
    // Predicated region
    $region2: #{tpu_custom_call.1} parent=1 // pred_check
      _
    $region3: #{tpu_custom_call.1} parent=1 // pred_check_branch
      %11 = sbr.rel (0) target = $region5
    $region4: #{tpu_custom_call.1} parent=1 // pred_region
      %s13 = ssub.s32 64, 64
      %14 = vsyncadd [#allocation3], %s13
      %s16 = sshll.u32 [#allocation2], 4
      %s17 = int_to_ptr.vmem [resolvable:$true] %s16
      %19 = dma.hbm_to_vmem [thread:$0]  %s0, 64, %s17, [#allocation3]
    $region5: #{tpu_custom_call.1} parent=1 // pred_fallthru
      _
    // Predicated region
    $region6: #{tpu_custom_call.1} parent=1 // pred_check
      _
    $region7: #{tpu_custom_call.1} parent=1 // pred_check_branch
      %21 = sbr.rel (0) target = $region9
    $region8: #{tpu_custom_call.1} parent=1 // pred_region
      %s23 = ssub.s32 512, 512
      %24 = vsyncadd [#allocation6], %s23
      %s25 = sshll.u32 [#allocation5], 4
      %s26 = int_to_ptr.vmem [resolvable:$true] %s25
      %31 = dma.hbm_to_vmem [thread:$0]  %s1, 512, %s26, [#allocation6], 256, 256, 16
    $region9: #{tpu_custom_call.1} parent=1 // pred_fallthru
      _
    // Predicated region
    $region10: #{tpu_custom_call.1} parent=1 // pred_check
      _
    $region11: #{tpu_custom_call.1} parent=1 // pred_check_branch
      %33 = sbr.rel (0) target = $region13
    $region12: #{tpu_custom_call.1} parent=1 // pred_region
      %34 = dma.done [#allocation3], 64
    $region13: #{tpu_custom_call.1} parent=1 // pred_fallthru
      _
    // Predicated region
    $region14: #{tpu_custom_call.1} parent=1 // pred_check
      _
    $region15: #{tpu_custom_call.1} parent=1 // pred_check_branch
      %36 = sbr.rel (0) target = $region17
    $region16: #{tpu_custom_call.1} parent=1 // pred_region
      %37 = dma.done [#allocation6], 512
    $region17: #{tpu_custom_call.1} parent=1 // pred_fallthru
      _
    %v38 = vld [vmem:[#allocation5] sm:$0xff]
    %v39 = vld [vmem:[#allocation5 + $0x8] sm:$0xff]
    %v40 = vld [vmem:[#allocation5 + $0x10] sm:$0xff]
    %v41 = vld [vmem:[#allocation5 + $0x18] sm:$0xff]
    %v42 = vld [vmem:[#allocation2] sm:$0xf]
    %v45 = vunpack.c.l.s4 1983009808
    %v46 = vunpack.c.0.s8 %v45
    %v47 = vlaneseq
    %v48 = vshrl.u32 %v47, 7
    %v49 = vsub.s32 %v46, %v48
    %v50 = vrot.slane %v42, %v49
    %v51 = vcombine.high %v50, %v50
    %54 = vst [vmem:[#allocation7] sm:$0x3] %v50
    %55 = vst [vmem:[#allocation7 + $0x8] sm:$0x3] %v51
    %v56 = vand.u32 2147483647, %v38
    %vm57 = vcmp.le.f32.partialorder %v56, 0.7853982
    %vm58 = vcmp.lt.s32.totalorder %v38, 0
    %v59 = vand.u32 %v38, 2139095040
    %v60 = vshrl.u32 %v59, 23
    %v61 = vsub.s32 %v60, 127
    %v62 = vand.u32 2147483647, %v38
    %v63 = vand.u32 %v62, 8388607
    %v64 = vor.u32 %v63, 8388608
    %v65 = vsub.s32 0, %v64
    %v66 = vadd.s32 %v61, 1
    %vm67 = vcmp.gt.s32.totalorder %v66, 0
    %v68 = vsel %vm67, %v66, 0
    %v69 = vshrl.u32 %v68, 5
    %v70 = vand.u32 %v68, 31
    %v71 = vsub.s32 32, %v70
    %v72 = vshrl.u32 683565275, %v71
    %v73 = vshll.u32 683565275, %v70
    %v74 = vshrl.u32 2475754826, %v71
    %v75 = vor.u32 %v73, %v74
    %v76 = vshll.u32 2475754826, %v70
    %v77 = vshrl.u32 2131351028, %v71
    %v78 = vor.u32 %v76, %v77
    %v79 = vshll.u32 2131351028, %v70
    %v80 = vshrl.u32 2102212464, %v71
    %v81 = vor.u32 %v79, %v80
    %v82 = vshll.u32 2102212464, %v70
    %v83 = vshrl.u32 920167782, %v71
    %v84 = vor.u32 %v82, %v83
    %v85 = vshll.u32 920167782, %v70
    %v86 = vshrl.u32 1326507024, %v71
    %v87 = vor.u32 %v85, %v86
    %vm88 = vcmp.lt.s32.totalorder %v69, 1
    %vm89 = vcmp.lt.s32.totalorder %v69, 2
    %vm90 = vcmp.lt.s32.totalorder %v69, 3
    %vm91 = vcmp.lt.s32.totalorder %v69, 4
    %v92 = vsel %vm88, %v72, %v75
    %v93 = vsel %vm91, %v81, 2102212464
    %v94 = vsel %vm90, %v78, %v93
    %v95 = vsel %vm89, %v92, %v94
    %v96 = vsel %vm88, %v75, %v78
    %v97 = vsel %vm91, %v84, 920167782
    %v98 = vsel %vm90, %v81, %v97
    %v99 = vsel %vm89, %v96, %v98
    %v100 = vsel %vm88, %v78, %v81
    %v101 = vsel %vm91, %v87, 1326507024
    %v102 = vsel %vm90, %v84, %v101
    %v103 = vsel %vm89, %v100, %v102
    %v104 = vshll.u32 %v64, 8
    %v105 = vmul.u32.u64.compose %v104, %v103
    %v106 = vextract.low.u32 %v105
    %v107 = vextract.high.u32 %v105
    %v108 = vmul.u32.u64.compose %v104, %v99
    %v109 = vextract.low.u32 %v108
    %v110 = vextract.high.u32 %v108
    %v111 = vmul.u32 %v104, %v95
    %v112 = vadd.s32 %v107, %v109
    %vm113 = vc.u32 %v107, %v109
    %v114 = vadd.s32 %v110, 1
    %v115 = vsel %vm113, %v114, %v110
    %v116 = vadd.s32 %v111, %v115
    %v117 = vadd.s32 %v116, 536870912
    %v118 = vshrl.u32 %v117, 30
    %v119 = vshll.u32 %v118, 30
    %v120 = vsub.s32 %v116, %v119
    %vm121 = vcmp.lt.s32.totalorder %v120, 0
    %v122 = vsub.s32 0, %v120
    %v123 = vsel %vm121, %v122, %v120
    %v124 = vclz %v123
    %v125 = vsub.s32 %v124, 2
    %vm126 = vcmp.gt.s32.totalorder 0, %v125
    %v127 = vsel %vm126, 0, %v125
    %v128 = vsub.s32 32, %v127
    %v129 = vshll.u32 %v120, %v127
    %v130 = vshrl.u32 %v112, %v128
    %v131 = vor.u32 %v129, %v130
    %v132 = vsub.s32 4294967266, %v127
    %v133 = vadd.s32 %v132, 127
    %v134 = vshll.u32 %v133, 23
    %v135 = vor.u32 4788187, %v134
    %v136 = vand.u32 2147483647, %v135
    %v138 = vcvt.s32.f32 %v131
    %v139 = vmul.f32 %v138, %v136
    %v140 = vxor.u32 %v139, 2147483648
    %v141 = vsel %vm58, %v140, %v139
    %v142 = vsub.s32 4, %v118
    %v143 = vsel %vm58, %v142, %v118
    %v144 = vsel %vm57, %v38, %v141
    %v145 = vsel %vm57, 0, %v143
    %v146 = vcosq.f32.pop %v144
    %v147 = vsinq.f32.pop %v144
    %vm148 = vweird.f32 %v38
    %v149 = vadd.s32 %v145, 3
    %v150 = vand.u32 %v149, 3
    %vm151 = vcmp.lt.s32.totalorder %v150, 2
    %vm152 = vcmp.eq.s32.totalorder %v150, 0
    %v153 = vxor.u32 %v147, 2147483648
    %v154 = vsel %vm152, %v146, %v153
    %vm155 = vcmp.eq.s32.totalorder %v150, 2
    %v156 = vxor.u32 %v146, 2147483648
    %v157 = vsel %vm155, %v156, %v147
    %v158 = vsel %vm151, %v154, %v157
    %v159 = vsel %vm148, nan, %v158
    %v160 = vand.u32 2147483647, %v39
    %vm161 = vcmp.le.f32.partialorder %v160, 0.7853982
    %vm162 = vcmp.lt.s32.totalorder %v39, 0
    %v163 = vand.u32 %v39, 2139095040
    %v164 = vshrl.u32 %v163, 23
    %v165 = vsub.s32 %v164, 127
    %v166 = vand.u32 2147483647, %v39
    %v167 = vand.u32 %v166, 8388607
    %v168 = vor.u32 %v167, 8388608
    %v169 = vsub.s32 0, %v168
    %v170 = vadd.s32 %v165, 1
    %vm171 = vcmp.gt.s32.totalorder %v170, 0
    %v172 = vsel %vm171, %v170, 0
    %v173 = vshrl.u32 %v172, 5
    %v174 = vand.u32 %v172, 31
    %v175 = vsub.s32 32, %v174
    %v176 = vshrl.u32 683565275, %v175
    %v177 = vshll.u32 683565275, %v174
    %v178 = vshrl.u32 2475754826, %v175
    %v179 = vor.u32 %v177, %v178
    %v180 = vshll.u32 2475754826, %v174
    %v181 = vshrl.u32 2131351028, %v175
    %v182 = vor.u32 %v180, %v181
    %v183 = vshll.u32 2131351028, %v174
    %v184 = vshrl.u32 2102212464, %v175
    %v185 = vor.u32 %v183, %v184
    %v186 = vshll.u32 2102212464, %v174
    %v187 = vshrl.u32 920167782, %v175
    %v188 = vor.u32 %v186, %v187
    %v189 = vshll.u32 920167782, %v174
    %v190 = vshrl.u32 1326507024, %v175
    %v191 = vor.u32 %v189, %v190
    %vm192 = vcmp.lt.s32.totalorder %v173, 1
    %vm193 = vcmp.lt.s32.totalorder %v173, 2
    %vm194 = vcmp.lt.s32.totalorder %v173, 3
    %vm195 = vcmp.lt.s32.totalorder %v173, 4
    %v196 = vsel %vm192, %v176, %v179
    %v197 = vsel %vm195, %v185, 2102212464
    %v198 = vsel %vm194, %v182, %v197
    %v199 = vsel %vm193, %v196, %v198
    %v200 = vsel %vm192, %v179, %v182
    %v201 = vsel %vm195, %v188, 920167782
    %v202 = vsel %vm194, %v185, %v201
    %v203 = vsel %vm193, %v200, %v202
    %v204 = vsel %vm192, %v182, %v185
    %v205 = vsel %vm195, %v191, 1326507024
    %v206 = vsel %vm194, %v188, %v205
    %v207 = vsel %vm193, %v204, %v206
    %v208 = vshll.u32 %v168, 8
    %v209 = vmul.u32.u64.compose %v208, %v207
    %v210 = vextract.low.u32 %v209
    %v211 = vextract.high.u32 %v209
    %v212 = vmul.u32.u64.compose %v208, %v203
    %v213 = vextract.low.u32 %v212
    %v214 = vextract.high.u32 %v212
    %v215 = vmul.u32 %v208, %v199
    %v216 = vadd.s32 %v211, %v213
    %vm217 = vc.u32 %v211, %v213
    %v218 = vadd.s32 %v214, 1
    %v219 = vsel %vm217, %v218, %v214
    %v220 = vadd.s32 %v215, %v219
    %v221 = vadd.s32 %v220, 536870912
    %v222 = vshrl.u32 %v221, 30
    %v223 = vshll.u32 %v222, 30
    %v224 = vsub.s32 %v220, %v223
    %vm225 = vcmp.lt.s32.totalorder %v224, 0
    %v226 = vsub.s32 0, %v224
    %v227 = vsel %vm225, %v226, %v224
    %v228 = vclz %v227
    %v229 = vsub.s32 %v228, 2
    %vm230 = vcmp.gt.s32.totalorder 0, %v229
    %v231 = vsel %vm230, 0, %v229
    %v232 = vsub.s32 32, %v231
    %v233 = vshll.u32 %v224, %v231
    %v234 = vshrl.u32 %v216, %v232
    %v235 = vor.u32 %v233, %v234
    %v236 = vsub.s32 4294967266, %v231
    %v237 = vadd.s32 %v236, 127
    %v238 = vshll.u32 %v237, 23
    %v239 = vor.u32 4788187, %v238
    %v240 = vand.u32 2147483647, %v239
    %v242 = vcvt.s32.f32 %v235
    %v243 = vmul.f32 %v242, %v240
    %v244 = vxor.u32 %v243, 2147483648
    %v245 = vsel %vm162, %v244, %v243
    %v246 = vsub.s32 4, %v222
    %v247 = vsel %vm162, %v246, %v222
    %v248 = vsel %vm161, %v39, %v245
    %v249 = vsel %vm161, 0, %v247
    %v250 = vcosq.f32.pop %v248
    %v251 = vsinq.f32.pop %v248
    %vm252 = vweird.f32 %v39
    %v253 = vadd.s32 %v249, 3
    %v254 = vand.u32 %v253, 3
    %vm255 = vcmp.lt.s32.totalorder %v254, 2
    %vm256 = vcmp.eq.s32.totalorder %v254, 0
    %v257 = vxor.u32 %v251, 2147483648
    %v258 = vsel %vm256, %v250, %v257
    %vm259 = vcmp.eq.s32.totalorder %v254, 2
    %v260 = vxor.u32 %v250, 2147483648
    %v261 = vsel %vm259, %v260, %v251
    %v262 = vsel %vm255, %v258, %v261
    %v263 = vsel %vm252, nan, %v262
    %v264 = vand.u32 2147483647, %v40
    %vm265 = vcmp.le.f32.partialorder %v264, 0.7853982
    %vm266 = vcmp.lt.s32.totalorder %v40, 0
    %v267 = vand.u32 %v40, 2139095040
    %v268 = vshrl.u32 %v267, 23
    %v269 = vsub.s32 %v268, 127
    %v270 = vand.u32 2147483647, %v40
    %v271 = vand.u32 %v270, 8388607
    %v272 = vor.u32 %v271, 8388608
    %v273 = vsub.s32 0, %v272
    %v274 = vadd.s32 %v269, 1
    %vm275 = vcmp.gt.s32.totalorder %v274, 0
    %v276 = vsel %vm275, %v274, 0
    %v277 = vshrl.u32 %v276, 5
    %v278 = vand.u32 %v276, 31
    %v279 = vsub.s32 32, %v278
    %v280 = vshrl.u32 683565275, %v279
    %v281 = vshll.u32 683565275, %v278
    %v282 = vshrl.u32 2475754826, %v279
    %v283 = vor.u32 %v281, %v282
    %v284 = vshll.u32 2475754826, %v278
    %v285 = vshrl.u32 2131351028, %v279
    %v286 = vor.u32 %v284, %v285
    %v287 = vshll.u32 2131351028, %v278
    %v288 = vshrl.u32 2102212464, %v279
    %v289 = vor.u32 %v287, %v288
    %v290 = vshll.u32 2102212464, %v278
    %v291 = vshrl.u32 920167782, %v279
    %v292 = vor.u32 %v290, %v291
    %v293 = vshll.u32 920167782, %v278
    %v294 = vshrl.u32 1326507024, %v279
    %v295 = vor.u32 %v293, %v294
    %vm296 = vcmp.lt.s32.totalorder %v277, 1
    %vm297 = vcmp.lt.s32.totalorder %v277, 2
    %vm298 = vcmp.lt.s32.totalorder %v277, 3
    %vm299 = vcmp.lt.s32.totalorder %v277, 4
    %v300 = vsel %vm296, %v280, %v283
    %v301 = vsel %vm299, %v289, 2102212464
    %v302 = vsel %vm298, %v286, %v301
    %v303 = vsel %vm297, %v300, %v302
    %v304 = vsel %vm296, %v283, %v286
    %v305 = vsel %vm299, %v292, 920167782
    %v306 = vsel %vm298, %v289, %v305
    %v307 = vsel %vm297, %v304, %v306
    %v308 = vsel %vm296, %v286, %v289
    %v309 = vsel %vm299, %v295, 1326507024
    %v310 = vsel %vm298, %v292, %v309
    %v311 = vsel %vm297, %v308, %v310
    %v312 = vshll.u32 %v272, 8
    %v313 = vmul.u32.u64.compose %v312, %v311
    %v314 = vextract.low.u32 %v313
    %v315 = vextract.high.u32 %v313
    %v316 = vmul.u32.u64.compose %v312, %v307
    %v317 = vextract.low.u32 %v316
    %v318 = vextract.high.u32 %v316
    %v319 = vmul.u32 %v312, %v303
    %v320 = vadd.s32 %v315, %v317
    %vm321 = vc.u32 %v315, %v317
    %v322 = vadd.s32 %v318, 1
    %v323 = vsel %vm321, %v322, %v318
    %v324 = vadd.s32 %v319, %v323
    %v325 = vadd.s32 %v324, 536870912
    %v326 = vshrl.u32 %v325, 30
    %v327 = vshll.u32 %v326, 30
    %v328 = vsub.s32 %v324, %v327
    %vm329 = vcmp.lt.s32.totalorder %v328, 0
    %v330 = vsub.s32 0, %v328
    %v331 = vsel %vm329, %v330, %v328
    %v332 = vclz %v331
    %v333 = vsub.s32 %v332, 2
    %vm334 = vcmp.gt.s32.totalorder 0, %v333
    %v335 = vsel %vm334, 0, %v333
    %v336 = vsub.s32 32, %v335
    %v337 = vshll.u32 %v328, %v335
    %v338 = vshrl.u32 %v320, %v336
    %v339 = vor.u32 %v337, %v338
    %v340 = vsub.s32 4294967266, %v335
    %v341 = vadd.s32 %v340, 127
    %v342 = vshll.u32 %v341, 23
    %v343 = vor.u32 4788187, %v342
    %v344 = vand.u32 2147483647, %v343
    %v346 = vcvt.s32.f32 %v339
    %v347 = vmul.f32 %v346, %v344
    %v348 = vxor.u32 %v347, 2147483648
    %v349 = vsel %vm266, %v348, %v347
    %v350 = vsub.s32 4, %v326
    %v351 = vsel %vm266, %v350, %v326
    %v352 = vsel %vm265, %v40, %v349
    %v353 = vsel %vm265, 0, %v351
    %v354 = vcosq.f32.pop %v352
    %v355 = vsinq.f32.pop %v352
    %vm356 = vweird.f32 %v40
    %v357 = vadd.s32 %v353, 3
    %v358 = vand.u32 %v357, 3
    %vm359 = vcmp.lt.s32.totalorder %v358, 2
    %vm360 = vcmp.eq.s32.totalorder %v358, 0
    %v361 = vxor.u32 %v355, 2147483648
    %v362 = vsel %vm360, %v354, %v361
    %vm363 = vcmp.eq.s32.totalorder %v358, 2
    %v364 = vxor.u32 %v354, 2147483648
    %v365 = vsel %vm363, %v364, %v355
    %v366 = vsel %vm359, %v362, %v365
    %v367 = vsel %vm356, nan, %v366
    %v368 = vand.u32 2147483647, %v41
    %vm369 = vcmp.le.f32.partialorder %v368, 0.7853982
    %vm370 = vcmp.lt.s32.totalorder %v41, 0
    %v371 = vand.u32 %v41, 2139095040
    %v372 = vshrl.u32 %v371, 23
    %v373 = vsub.s32 %v372, 127
    %v374 = vand.u32 2147483647, %v41
    %v375 = vand.u32 %v374, 8388607
    %v376 = vor.u32 %v375, 8388608
    %v377 = vsub.s32 0, %v376
    %v378 = vadd.s32 %v373, 1
    %vm379 = vcmp.gt.s32.totalorder %v378, 0
    %v380 = vsel %vm379, %v378, 0
    %v381 = vshrl.u32 %v380, 5
    %v382 = vand.u32 %v380, 31
    %v383 = vsub.s32 32, %v382
    %v384 = vshrl.u32 683565275, %v383
    %v385 = vshll.u32 683565275, %v382
    %v386 = vshrl.u32 2475754826, %v383
    %v387 = vor.u32 %v385, %v386
    %v388 = vshll.u32 2475754826, %v382
    %v389 = vshrl.u32 2131351028, %v383
    %v390 = vor.u32 %v388, %v389
    %v391 = vshll.u32 2131351028, %v382
    %v392 = vshrl.u32 2102212464, %v383
    %v393 = vor.u32 %v391, %v392
    %v394 = vshll.u32 2102212464, %v382
    %v395 = vshrl.u32 920167782, %v383
    %v396 = vor.u32 %v394, %v395
    %v397 = vshll.u32 920167782, %v382
    %v398 = vshrl.u32 1326507024, %v383
    %v399 = vor.u32 %v397, %v398
    %vm400 = vcmp.lt.s32.totalorder %v381, 1
    %vm401 = vcmp.lt.s32.totalorder %v381, 2
    %vm402 = vcmp.lt.s32.totalorder %v381, 3
    %vm403 = vcmp.lt.s32.totalorder %v381, 4
    %v404 = vsel %vm400, %v384, %v387
    %v405 = vsel %vm403, %v393, 2102212464
    %v406 = vsel %vm402, %v390, %v405
    %v407 = vsel %vm401, %v404, %v406
    %v408 = vsel %vm400, %v387, %v390
    %v409 = vsel %vm403, %v396, 920167782
    %v410 = vsel %vm402, %v393, %v409
    %v411 = vsel %vm401, %v408, %v410
    %v412 = vsel %vm400, %v390, %v393
    %v413 = vsel %vm403, %v399, 1326507024
    %v414 = vsel %vm402, %v396, %v413
    %v415 = vsel %vm401, %v412, %v414
    %v416 = vshll.u32 %v376, 8
    %v417 = vmul.u32.u64.compose %v416, %v415
    %v418 = vextract.low.u32 %v417
    %v419 = vextract.high.u32 %v417
    %v420 = vmul.u32.u64.compose %v416, %v411
    %v421 = vextract.low.u32 %v420
    %v422 = vextract.high.u32 %v420
    %v423 = vmul.u32 %v416, %v407
    %v424 = vadd.s32 %v419, %v421
    %vm425 = vc.u32 %v419, %v421
    %v426 = vadd.s32 %v422, 1
    %v427 = vsel %vm425, %v426, %v422
    %v428 = vadd.s32 %v423, %v427
    %v429 = vadd.s32 %v428, 536870912
    %v430 = vshrl.u32 %v429, 30
    %v431 = vshll.u32 %v430, 30
    %v432 = vsub.s32 %v428, %v431
    %vm433 = vcmp.lt.s32.totalorder %v432, 0
    %v434 = vsub.s32 0, %v432
    %v435 = vsel %vm433, %v434, %v432
    %v436 = vclz %v435
    %v437 = vsub.s32 %v436, 2
    %vm438 = vcmp.gt.s32.totalorder 0, %v437
    %v439 = vsel %vm438, 0, %v437
    %v440 = vsub.s32 32, %v439
    %v441 = vshll.u32 %v432, %v439
    %v442 = vshrl.u32 %v424, %v440
    %v443 = vor.u32 %v441, %v442
    %v444 = vsub.s32 4294967266, %v439
    %v445 = vadd.s32 %v444, 127
    %v446 = vshll.u32 %v445, 23
    %v447 = vor.u32 4788187, %v446
    %v448 = vand.u32 2147483647, %v447
    %v450 = vcvt.s32.f32 %v443
    %v451 = vmul.f32 %v450, %v448
    %v452 = vxor.u32 %v451, 2147483648
    %v453 = vsel %vm370, %v452, %v451
    %v454 = vsub.s32 4, %v430
    %v455 = vsel %vm370, %v454, %v430
    %v456 = vsel %vm369, %v41, %v453
    %v457 = vsel %vm369, 0, %v455
    %v458 = vcosq.f32.pop %v456
    %v459 = vsinq.f32.pop %v456
    %vm460 = vweird.f32 %v41
    %v461 = vadd.s32 %v457, 3
    %v462 = vand.u32 %v461, 3
    %vm463 = vcmp.lt.s32.totalorder %v462, 2
    %vm464 = vcmp.eq.s32.totalorder %v462, 0
    %v465 = vxor.u32 %v459, 2147483648
    %v466 = vsel %vm464, %v458, %v465
    %vm467 = vcmp.eq.s32.totalorder %v462, 2
    %v468 = vxor.u32 %v458, 2147483648
    %v469 = vsel %vm467, %v468, %v459
    %v470 = vsel %vm463, %v466, %v469
    %v471 = vsel %vm460, nan, %v470
    %vm476 = vcmask 1041408
    %v477 = vrot.slane %v159, 6
    %v478 = vrot.slane %v263, 6
    %v479 = vrot.slane %v367, 6
    %v480 = vsel %vm476, %v477, %v479
    %v481 = vrot.slane %v471, 6
    %v482 = vsel %vm476, %v478, %v481
    %489 = vst [vmem:[#allocation7] sm:$0xfc] %v477
    %490 = vst [vmem:[#allocation7 + $0x8] sm:$0xfc] %v478
    %491 = vst [vmem:[#allocation7 + $0x10] sm:$0xff] %v480
    %492 = vst [vmem:[#allocation7 + $0x18] sm:$0xff] %v482
    %493 = vst [vmem:[#allocation7 + $0x20] sm:$0x3] %v479
    %494 = vst [vmem:[#allocation7 + $0x28] sm:$0x3] %v481
    %v495 = vand.u32 2147483647, %v38
    %vm496 = vcmp.le.f32.partialorder %v495, 0.7853982
    %vm497 = vcmp.lt.s32.totalorder %v38, 0
    %v498 = vand.u32 %v38, 2139095040
    %v499 = vshrl.u32 %v498, 23
    %v500 = vsub.s32 %v499, 127
    %v501 = vand.u32 2147483647, %v38
    %v502 = vand.u32 %v501, 8388607
    %v503 = vor.u32 %v502, 8388608
    %v504 = vsub.s32 0, %v503
    %v505 = vadd.s32 %v500, 1
    %vm506 = vcmp.gt.s32.totalorder %v505, 0
    %v507 = vsel %vm506, %v505, 0
    %v508 = vshrl.u32 %v507, 5
    %v509 = vand.u32 %v507, 31
    %v510 = vsub.s32 32, %v509
    %v511 = vshrl.u32 683565275, %v510
    %v512 = vshll.u32 683565275, %v509
    %v513 = vshrl.u32 2475754826, %v510
    %v514 = vor.u32 %v512, %v513
    %v515 = vshll.u32 2475754826, %v509
    %v516 = vshrl.u32 2131351028, %v510
    %v517 = vor.u32 %v515, %v516
    %v518 = vshll.u32 2131351028, %v509
    %v519 = vshrl.u32 2102212464, %v510
    %v520 = vor.u32 %v518, %v519
    %v521 = vshll.u32 2102212464, %v509
    %v522 = vshrl.u32 920167782, %v510
    %v523 = vor.u32 %v521, %v522
    %v524 = vshll.u32 920167782, %v509
    %v525 = vshrl.u32 1326507024, %v510
    %v526 = vor.u32 %v524, %v525
    %vm527 = vcmp.lt.s32.totalorder %v508, 1
    %vm528 = vcmp.lt.s32.totalorder %v508, 2
    %vm529 = vcmp.lt.s32.totalorder %v508, 3
    %vm530 = vcmp.lt.s32.totalorder %v508, 4
    %v531 = vsel %vm527, %v511, %v514
    %v532 = vsel %vm530, %v520, 2102212464
    %v533 = vsel %vm529, %v517, %v532
    %v534 = vsel %vm528, %v531, %v533
    %v535 = vsel %vm527, %v514, %v517
    %v536 = vsel %vm530, %v523, 920167782
    %v537 = vsel %vm529, %v520, %v536
    %v538 = vsel %vm528, %v535, %v537
    %v539 = vsel %vm527, %v517, %v520
    %v540 = vsel %vm530, %v526, 1326507024
    %v541 = vsel %vm529, %v523, %v540
    %v542 = vsel %vm528, %v539, %v541
    %v543 = vshll.u32 %v503, 8
    %v544 = vmul.u32.u64.compose %v543, %v542
    %v545 = vextract.low.u32 %v544
    %v546 = vextract.high.u32 %v544
    %v547 = vmul.u32.u64.compose %v543, %v538
    %v548 = vextract.low.u32 %v547
    %v549 = vextract.high.u32 %v547
    %v550 = vmul.u32 %v543, %v534
    %v551 = vadd.s32 %v546, %v548
    %vm552 = vc.u32 %v546, %v548
    %v553 = vadd.s32 %v549, 1
    %v554 = vsel %vm552, %v553, %v549
    %v555 = vadd.s32 %v550, %v554
    %v556 = vadd.s32 %v555, 536870912
    %v557 = vshrl.u32 %v556, 30
    %v558 = vshll.u32 %v557, 30
    %v559 = vsub.s32 %v555, %v558
    %vm560 = vcmp.lt.s32.totalorder %v559, 0
    %v561 = vsub.s32 0, %v559
    %v562 = vsel %vm560, %v561, %v559
    %v563 = vclz %v562
    %v564 = vsub.s32 %v563, 2
    %vm565 = vcmp.gt.s32.totalorder 0, %v564
    %v566 = vsel %vm565, 0, %v564
    %v567 = vsub.s32 32, %v566
    %v568 = vshll.u32 %v559, %v566
    %v569 = vshrl.u32 %v551, %v567
    %v570 = vor.u32 %v568, %v569
    %v571 = vsub.s32 4294967266, %v566
    %v572 = vadd.s32 %v571, 127
    %v573 = vshll.u32 %v572, 23
    %v574 = vor.u32 4788187, %v573
    %v575 = vand.u32 2147483647, %v574
    %v577 = vcvt.s32.f32 %v570
    %v578 = vmul.f32 %v577, %v575
    %v579 = vxor.u32 %v578, 2147483648
    %v580 = vsel %vm497, %v579, %v578
    %v581 = vsub.s32 4, %v557
    %v582 = vsel %vm497, %v581, %v557
    %v583 = vsel %vm496, %v38, %v580
    %v584 = vsel %vm496, 0, %v582
    %v585 = vcosq.f32.pop %v583
    %v586 = vsinq.f32.pop %v583
    %vm587 = vweird.f32 %v38
    %v588 = vand.u32 %v584, 3
    %vm589 = vcmp.lt.s32.totalorder %v588, 2
    %vm590 = vcmp.eq.s32.totalorder %v588, 0
    %v591 = vxor.u32 %v586, 2147483648
    %v592 = vsel %vm590, %v585, %v591
    %vm593 = vcmp.eq.s32.totalorder %v588, 2
    %v594 = vxor.u32 %v585, 2147483648
    %v595 = vsel %vm593, %v594, %v586
    %v596 = vsel %vm589, %v592, %v595
    %v597 = vsel %vm587, nan, %v596
    %v598 = vand.u32 2147483647, %v39
    %vm599 = vcmp.le.f32.partialorder %v598, 0.7853982
    %vm600 = vcmp.lt.s32.totalorder %v39, 0
    %v601 = vand.u32 %v39, 2139095040
    %v602 = vshrl.u32 %v601, 23
    %v603 = vsub.s32 %v602, 127
    %v604 = vand.u32 2147483647, %v39
    %v605 = vand.u32 %v604, 8388607
    %v606 = vor.u32 %v605, 8388608
    %v607 = vsub.s32 0, %v606
    %v608 = vadd.s32 %v603, 1
    %vm609 = vcmp.gt.s32.totalorder %v608, 0
    %v610 = vsel %vm609, %v608, 0
    %v611 = vshrl.u32 %v610, 5
    %v612 = vand.u32 %v610, 31
    %v613 = vsub.s32 32, %v612
    %v614 = vshrl.u32 683565275, %v613
    %v615 = vshll.u32 683565275, %v612
    %v616 = vshrl.u32 2475754826, %v613
    %v617 = vor.u32 %v615, %v616
    %v618 = vshll.u32 2475754826, %v612
    %v619 = vshrl.u32 2131351028, %v613
    %v620 = vor.u32 %v618, %v619
    %v621 = vshll.u32 2131351028, %v612
    %v622 = vshrl.u32 2102212464, %v613
    %v623 = vor.u32 %v621, %v622
    %v624 = vshll.u32 2102212464, %v612
    %v625 = vshrl.u32 920167782, %v613
    %v626 = vor.u32 %v624, %v625
    %v627 = vshll.u32 920167782, %v612
    %v628 = vshrl.u32 1326507024, %v613
    %v629 = vor.u32 %v627, %v628
    %vm630 = vcmp.lt.s32.totalorder %v611, 1
    %vm631 = vcmp.lt.s32.totalorder %v611, 2
    %vm632 = vcmp.lt.s32.totalorder %v611, 3
    %vm633 = vcmp.lt.s32.totalorder %v611, 4
    %v634 = vsel %vm630, %v614, %v617
    %v635 = vsel %vm633, %v623, 2102212464
    %v636 = vsel %vm632, %v620, %v635
    %v637 = vsel %vm631, %v634, %v636
    %v638 = vsel %vm630, %v617, %v620
    %v639 = vsel %vm633, %v626, 920167782
    %v640 = vsel %vm632, %v623, %v639
    %v641 = vsel %vm631, %v638, %v640
    %v642 = vsel %vm630, %v620, %v623
    %v643 = vsel %vm633, %v629, 1326507024
    %v644 = vsel %vm632, %v626, %v643
    %v645 = vsel %vm631, %v642, %v644
    %v646 = vshll.u32 %v606, 8
    %v647 = vmul.u32.u64.compose %v646, %v645
    %v648 = vextract.low.u32 %v647
    %v649 = vextract.high.u32 %v647
    %v650 = vmul.u32.u64.compose %v646, %v641
    %v651 = vextract.low.u32 %v650
    %v652 = vextract.high.u32 %v650
    %v653 = vmul.u32 %v646, %v637
    %v654 = vadd.s32 %v649, %v651
    %vm655 = vc.u32 %v649, %v651
    %v656 = vadd.s32 %v652, 1
    %v657 = vsel %vm655, %v656, %v652
    %v658 = vadd.s32 %v653, %v657
    %v659 = vadd.s32 %v658, 536870912
    %v660 = vshrl.u32 %v659, 30
    %v661 = vshll.u32 %v660, 30
    %v662 = vsub.s32 %v658, %v661
    %vm663 = vcmp.lt.s32.totalorder %v662, 0
    %v664 = vsub.s32 0, %v662
    %v665 = vsel %vm663, %v664, %v662
    %v666 = vclz %v665
    %v667 = vsub.s32 %v666, 2
    %vm668 = vcmp.gt.s32.totalorder 0, %v667
    %v669 = vsel %vm668, 0, %v667
    %v670 = vsub.s32 32, %v669
    %v671 = vshll.u32 %v662, %v669
    %v672 = vshrl.u32 %v654, %v670
    %v673 = vor.u32 %v671, %v672
    %v674 = vsub.s32 4294967266, %v669
    %v675 = vadd.s32 %v674, 127
    %v676 = vshll.u32 %v675, 23
    %v677 = vor.u32 4788187, %v676
    %v678 = vand.u32 2147483647, %v677
    %v680 = vcvt.s32.f32 %v673
    %v681 = vmul.f32 %v680, %v678
    %v682 = vxor.u32 %v681, 2147483648
    %v683 = vsel %vm600, %v682, %v681
    %v684 = vsub.s32 4, %v660
    %v685 = vsel %vm600, %v684, %v660
    %v686 = vsel %vm599, %v39, %v683
    %v687 = vsel %vm599, 0, %v685
    %v688 = vcosq.f32.pop %v686
    %v689 = vsinq.f32.pop %v686
    %vm690 = vweird.f32 %v39
    %v691 = vand.u32 %v687, 3
    %vm692 = vcmp.lt.s32.totalorder %v691, 2
    %vm693 = vcmp.eq.s32.totalorder %v691, 0
    %v694 = vxor.u32 %v689, 2147483648
    %v695 = vsel %vm693, %v688, %v694
    %vm696 = vcmp.eq.s32.totalorder %v691, 2
    %v697 = vxor.u32 %v688, 2147483648
    %v698 = vsel %vm696, %v697, %v689
    %v699 = vsel %vm692, %v695, %v698
    %v700 = vsel %vm690, nan, %v699
    %v701 = vand.u32 2147483647, %v40
    %vm702 = vcmp.le.f32.partialorder %v701, 0.7853982
    %vm703 = vcmp.lt.s32.totalorder %v40, 0
    %v704 = vand.u32 %v40, 2139095040
    %v705 = vshrl.u32 %v704, 23
    %v706 = vsub.s32 %v705, 127
    %v707 = vand.u32 2147483647, %v40
    %v708 = vand.u32 %v707, 8388607
    %v709 = vor.u32 %v708, 8388608
    %v710 = vsub.s32 0, %v709
    %v711 = vadd.s32 %v706, 1
    %vm712 = vcmp.gt.s32.totalorder %v711, 0
    %v713 = vsel %vm712, %v711, 0
    %v714 = vshrl.u32 %v713, 5
    %v715 = vand.u32 %v713, 31
    %v716 = vsub.s32 32, %v715
    %v717 = vshrl.u32 683565275, %v716
    %v718 = vshll.u32 683565275, %v715
    %v719 = vshrl.u32 2475754826, %v716
    %v720 = vor.u32 %v718, %v719
    %v721 = vshll.u32 2475754826, %v715
    %v722 = vshrl.u32 2131351028, %v716
    %v723 = vor.u32 %v721, %v722
    %v724 = vshll.u32 2131351028, %v715
    %v725 = vshrl.u32 2102212464, %v716
    %v726 = vor.u32 %v724, %v725
    %v727 = vshll.u32 2102212464, %v715
    %v728 = vshrl.u32 920167782, %v716
    %v729 = vor.u32 %v727, %v728
    %v730 = vshll.u32 920167782, %v715
    %v731 = vshrl.u32 1326507024, %v716
    %v732 = vor.u32 %v730, %v731
    %vm733 = vcmp.lt.s32.totalorder %v714, 1
    %vm734 = vcmp.lt.s32.totalorder %v714, 2
    %vm735 = vcmp.lt.s32.totalorder %v714, 3
    %vm736 = vcmp.lt.s32.totalorder %v714, 4
    %v737 = vsel %vm733, %v717, %v720
    %v738 = vsel %vm736, %v726, 2102212464
    %v739 = vsel %vm735, %v723, %v738
    %v740 = vsel %vm734, %v737, %v739
    %v741 = vsel %vm733, %v720, %v723
    %v742 = vsel %vm736, %v729, 920167782
    %v743 = vsel %vm735, %v726, %v742
    %v744 = vsel %vm734, %v741, %v743
    %v745 = vsel %vm733, %v723, %v726
    %v746 = vsel %vm736, %v732, 1326507024
    %v747 = vsel %vm735, %v729, %v746
    %v748 = vsel %vm734, %v745, %v747
    %v749 = vshll.u32 %v709, 8
    %v750 = vmul.u32.u64.compose %v749, %v748
    %v751 = vextract.low.u32 %v750
    %v752 = vextract.high.u32 %v750
    %v753 = vmul.u32.u64.compose %v749, %v744
    %v754 = vextract.low.u32 %v753
    %v755 = vextract.high.u32 %v753
    %v756 = vmul.u32 %v749, %v740
    %v757 = vadd.s32 %v752, %v754
    %vm758 = vc.u32 %v752, %v754
    %v759 = vadd.s32 %v755, 1
    %v760 = vsel %vm758, %v759, %v755
    %v761 = vadd.s32 %v756, %v760
    %v762 = vadd.s32 %v761, 536870912
    %v763 = vshrl.u32 %v762, 30
    %v764 = vshll.u32 %v763, 30
    %v765 = vsub.s32 %v761, %v764
    %vm766 = vcmp.lt.s32.totalorder %v765, 0
    %v767 = vsub.s32 0, %v765
    %v768 = vsel %vm766, %v767, %v765
    %v769 = vclz %v768
    %v770 = vsub.s32 %v769, 2
    %vm771 = vcmp.gt.s32.totalorder 0, %v770
    %v772 = vsel %vm771, 0, %v770
    %v773 = vsub.s32 32, %v772
    %v774 = vshll.u32 %v765, %v772
    %v775 = vshrl.u32 %v757, %v773
    %v776 = vor.u32 %v774, %v775
    %v777 = vsub.s32 4294967266, %v772
    %v778 = vadd.s32 %v777, 127
    %v779 = vshll.u32 %v778, 23
    %v780 = vor.u32 4788187, %v779
    %v781 = vand.u32 2147483647, %v780
    %v783 = vcvt.s32.f32 %v776
    %v784 = vmul.f32 %v783, %v781
    %v785 = vxor.u32 %v784, 2147483648
    %v786 = vsel %vm703, %v785, %v784
    %v787 = vsub.s32 4, %v763
    %v788 = vsel %vm703, %v787, %v763
    %v789 = vsel %vm702, %v40, %v786
    %v790 = vsel %vm702, 0, %v788
    %v791 = vcosq.f32.pop %v789
    %v792 = vsinq.f32.pop %v789
    %vm793 = vweird.f32 %v40
    %v794 = vand.u32 %v790, 3
    %vm795 = vcmp.lt.s32.totalorder %v794, 2
    %vm796 = vcmp.eq.s32.totalorder %v794, 0
    %v797 = vxor.u32 %v792, 2147483648
    %v798 = vsel %vm796, %v791, %v797
    %vm799 = vcmp.eq.s32.totalorder %v794, 2
    %v800 = vxor.u32 %v791, 2147483648
    %v801 = vsel %vm799, %v800, %v792
    %v802 = vsel %vm795, %v798, %v801
    %v803 = vsel %vm793, nan, %v802
    %v804 = vand.u32 2147483647, %v41
    %vm805 = vcmp.le.f32.partialorder %v804, 0.7853982
    %vm806 = vcmp.lt.s32.totalorder %v41, 0
    %v807 = vand.u32 %v41, 2139095040
    %v808 = vshrl.u32 %v807, 23
    %v809 = vsub.s32 %v808, 127
    %v810 = vand.u32 2147483647, %v41
    %v811 = vand.u32 %v810, 8388607
    %v812 = vor.u32 %v811, 8388608
    %v813 = vsub.s32 0, %v812
    %v814 = vadd.s32 %v809, 1
    %vm815 = vcmp.gt.s32.totalorder %v814, 0
    %v816 = vsel %vm815, %v814, 0
    %v817 = vshrl.u32 %v816, 5
    %v818 = vand.u32 %v816, 31
    %v819 = vsub.s32 32, %v818
    %v820 = vshrl.u32 683565275, %v819
    %v821 = vshll.u32 683565275, %v818
    %v822 = vshrl.u32 2475754826, %v819
    %v823 = vor.u32 %v821, %v822
    %v824 = vshll.u32 2475754826, %v818
    %v825 = vshrl.u32 2131351028, %v819
    %v826 = vor.u32 %v824, %v825
    %v827 = vshll.u32 2131351028, %v818
    %v828 = vshrl.u32 2102212464, %v819
    %v829 = vor.u32 %v827, %v828
    %v830 = vshll.u32 2102212464, %v818
    %v831 = vshrl.u32 920167782, %v819
    %v832 = vor.u32 %v830, %v831
    %v833 = vshll.u32 920167782, %v818
    %v834 = vshrl.u32 1326507024, %v819
    %v835 = vor.u32 %v833, %v834
    %vm836 = vcmp.lt.s32.totalorder %v817, 1
    %vm837 = vcmp.lt.s32.totalorder %v817, 2
    %vm838 = vcmp.lt.s32.totalorder %v817, 3
    %vm839 = vcmp.lt.s32.totalorder %v817, 4
    %v840 = vsel %vm836, %v820, %v823
    %v841 = vsel %vm839, %v829, 2102212464
    %v842 = vsel %vm838, %v826, %v841
    %v843 = vsel %vm837, %v840, %v842
    %v844 = vsel %vm836, %v823, %v826
    %v845 = vsel %vm839, %v832, 920167782
    %v846 = vsel %vm838, %v829, %v845
    %v847 = vsel %vm837, %v844, %v846
    %v848 = vsel %vm836, %v826, %v829
    %v849 = vsel %vm839, %v835, 1326507024
    %v850 = vsel %vm838, %v832, %v849
    %v851 = vsel %vm837, %v848, %v850
    %v852 = vshll.u32 %v812, 8
    %v853 = vmul.u32.u64.compose %v852, %v851
    %v854 = vextract.low.u32 %v853
    %v855 = vextract.high.u32 %v853
    %v856 = vmul.u32.u64.compose %v852, %v847
    %v857 = vextract.low.u32 %v856
    %v858 = vextract.high.u32 %v856
    %v859 = vmul.u32 %v852, %v843
    %v860 = vadd.s32 %v855, %v857
    %vm861 = vc.u32 %v855, %v857
    %v862 = vadd.s32 %v858, 1
    %v863 = vsel %vm861, %v862, %v858
    %v864 = vadd.s32 %v859, %v863
    %v865 = vadd.s32 %v864, 536870912
    %v866 = vshrl.u32 %v865, 30
    %v867 = vshll.u32 %v866, 30
    %v868 = vsub.s32 %v864, %v867
    %vm869 = vcmp.lt.s32.totalorder %v868, 0
    %v870 = vsub.s32 0, %v868
    %v871 = vsel %vm869, %v870, %v868
    %v872 = vclz %v871
    %v873 = vsub.s32 %v872, 2
    %vm874 = vcmp.gt.s32.totalorder 0, %v873
    %v875 = vsel %vm874, 0, %v873
    %v876 = vsub.s32 32, %v875
    %v877 = vshll.u32 %v868, %v875
    %v878 = vshrl.u32 %v860, %v876
    %v879 = vor.u32 %v877, %v878
    %v880 = vsub.s32 4294967266, %v875
    %v881 = vadd.s32 %v880, 127
    %v882 = vshll.u32 %v881, 23
    %v883 = vor.u32 4788187, %v882
    %v884 = vand.u32 2147483647, %v883
    %v886 = vcvt.s32.f32 %v879
    %v887 = vmul.f32 %v886, %v884
    %v888 = vxor.u32 %v887, 2147483648
    %v889 = vsel %vm806, %v888, %v887
    %v890 = vsub.s32 4, %v866
    %v891 = vsel %vm806, %v890, %v866
    %v892 = vsel %vm805, %v41, %v889
    %v893 = vsel %vm805, 0, %v891
    %v894 = vcosq.f32.pop %v892
    %v895 = vsinq.f32.pop %v892
    %vm896 = vweird.f32 %v41
    %v897 = vand.u32 %v893, 3
    %vm898 = vcmp.lt.s32.totalorder %v897, 2
    %vm899 = vcmp.eq.s32.totalorder %v897, 0
    %v900 = vxor.u32 %v895, 2147483648
    %v901 = vsel %vm899, %v894, %v900
    %vm902 = vcmp.eq.s32.totalorder %v897, 2
    %v903 = vxor.u32 %v894, 2147483648
    %v904 = vsel %vm902, %v903, %v895
    %v905 = vsel %vm898, %v901, %v904
    %v906 = vsel %vm896, nan, %v905
    %v911 = vrot.slane %v597, 6
    %v912 = vrot.slane %v700, 6
    %v913 = vrot.slane %v803, 6
    %v914 = vsel %vm476, %v911, %v913
    %v915 = vrot.slane %v906, 6
    %v916 = vsel %vm476, %v912, %v915
    %923 = vst [vmem:[#allocation7 + $0x20] sm:$0xfc] %v911
    %924 = vst [vmem:[#allocation7 + $0x28] sm:$0xfc] %v912
    %925 = vst [vmem:[#allocation7 + $0x30] sm:$0xff] %v914
    %926 = vst [vmem:[#allocation7 + $0x38] sm:$0xff] %v916
    %927 = vst [vmem:[#allocation7 + $0x40] sm:$0x3] %v913
    %928 = vst [vmem:[#allocation7 + $0x48] sm:$0x3] %v915
    // Predicated region
    $region18: #{tpu_custom_call.1} parent=1 // pred_check
      _
    $region19: #{tpu_custom_call.1} parent=1 // pred_check_branch
      %930 = sbr.rel (0) target = $region21
    $region20: #{tpu_custom_call.1} parent=1 // pred_region
      %s932 = ssub.s32 1280, 1280
      %933 = vsyncadd [#allocation4], %s932
      %s934 = sshll.u32 [#allocation7], 4
      %s935 = int_to_ptr.vmem [resolvable:$true] %s934
      %940 = dma.vmem_to_hbm [thread:$0]  %s935, 1280, %s2, [#allocation4], 256, 256, 16
    $region21: #{tpu_custom_call.1} parent=1 // pred_fallthru
      _
    // Predicated region
    $region22: #{tpu_custom_call.1} parent=1 // pred_check
      _
    $region23: #{tpu_custom_call.1} parent=1 // pred_check_branch
      %942 = sbr.rel (0) target = $region25
    $region24: #{tpu_custom_call.1} parent=1 // pred_region
      %943 = dma.done [#allocation4], 1280
    $region25: #{tpu_custom_call.1} parent=1 // pred_fallthru
      _
    %944 = vsyncpa [#allocation3], 1
    %945 = vsyncpa [#allocation6], 1
    %946 = vsyncpa [#allocation4], 1

</llo_original>
